<compile_context>
chip_gen: v5e
topology: v5e:2x2
jax: 0.10.0
libtpu: 0.0.40
codegen_flags: <defaults>
</compile_context>

<pallas_src>
import functools

import jax
import jax.numpy as jnp
import numpy as np
from jax.experimental import pallas as pl
from jax.experimental.pallas import tpu as pltpu

ALPHA = 0.667   # module default mixture weight
SCALE = 2       # module default scale_factor (kernel specialized to sf=2)


# --------------------------------------------------------------------------------------
# Kernels
# --------------------------------------------------------------------------------------
def _combo_batch_kernel(x_ref, o_ref, *, c0, c1):
    """Block: x (bt, L, C) -> o (bt, L, 2C).  Full sequence per block; edges clamp to self."""
    bt, L, C = x_ref.shape
    n = bt * L

    # One full-width pass over the flattened (bt*L, C) slab (f32 compute).
    x = x_ref[...].astype(jnp.float32).reshape(n, C)

    # Neighbour shifts via XLU sublane rolls.  Rows that wrap across batch-slab
    # boundaries are exactly the per-slab edge rows, which the clamp overwrites.
    x_prev = pltpu.roll(x, 1, axis=0)         # x_prev[r] = x[r-1]
    x_next = pltpu.roll(x, n - 1, axis=0)     # x_next[r] = x[r+1]

    # Per-slab row index (0..L-1): 3-D iota reshaped to 2-D (no modulo, no broadcasts).
    row = jax.lax.broadcasted_iota(jnp.int32, (bt, L, C), 1).reshape(n, C)
    x_prev = jnp.where(row == 0, x, x_prev)          # clamp x[-1] := x[0]
    x_next = jnp.where(row == L - 1, x, x_next)      # clamp x[L]  := x[L-1]

    even = c0 * x + c1 * x_prev                      # output rows 2j   -> lanes [0, C)
    odd = c0 * x + c1 * x_next                       # output rows 2j+1 -> lanes [C, 2C)

    if C % 128 == 0:     # lane-aligned: two unmasked full-width stores
        o_ref[:, :, :C] = even.reshape(bt, L, C).astype(o_ref.dtype)
        o_ref[:, :, C:] = odd.reshape(bt, L, C).astype(o_ref.dtype)
    else:                # keep the store lane-dense: one contiguous (bt, L, 2C) store
        out = jnp.concatenate([even, odd], axis=-1)  # (n, 2C)
        o_ref[...] = out.reshape(bt, L, 2 * C).astype(o_ref.dtype)


def _combo_ltiled_kernel(x_ref, halo_ref, o_ref, *, c0, c1):
    """Block: x (1, Lt, C), halo (1, 1, 2, C) = [row Lt*li - 1, row Lt*(li+1)] (edge-clamped),
    o (1, Lt, 2C).  bt == 1 in this path, so halo rows broadcast as plain (C,) lane vectors."""
    _, Lt, C = x_ref.shape
    x = x_ref[0].astype(jnp.float32)                 # (Lt, C)

    x_prev = pltpu.roll(x, 1, axis=0)
    x_next = pltpu.roll(x, Lt - 1, axis=0)

    halo = halo_ref[...].astype(jnp.float32).reshape(2, C)
    row = jax.lax.broadcasted_iota(jnp.int32, (Lt, C), 0)
    x_prev = jnp.where(row == 0, halo[0], x_prev)          # previous tile's last row
    x_next = jnp.where(row == Lt - 1, halo[1], x_next)     # next tile's first row

    even = c0 * x + c1 * x_prev
    odd = c0 * x + c1 * x_next

    if C % 128 == 0:
        o_ref[0, :, :C] = even.astype(o_ref.dtype)
        o_ref[0, :, C:] = odd.astype(o_ref.dtype)
    else:
        o_ref[0] = jnp.concatenate([even, odd], axis=-1).astype(o_ref.dtype)


# --------------------------------------------------------------------------------------
# Tiling heuristic
# --------------------------------------------------------------------------------------
def _choose_tiling(B, L, C, itemsize, vmem_budget):
    """Pick (bt, Lt): batch rows and sequence rows per grid step.  Lt < L implies bt == 1."""
    row_hbm = 3 * C * itemsize              # HBM bytes per (b, l) row: read C + write 2C
    row_vmem = 2 * row_hbm + 5 * C * 4      # double-buffered in/out blocks + f32 temporaries
    rows_cap = max(1, (4 << 20) // row_hbm) # ~4 MiB of HBM traffic per step (roofline plateau)
    max_rows = max(1, vmem_budget // row_vmem)

    # Valid sequence tiles: full L, or divisors of L that are multiples of 8
    # (the (8, 128) rule applies to the (Lt, C) / (Lt, 2C) trailing block dims).
    l_tiles = [d for d in range(L, 0, -1) if L % d == 0 and (d == L or d % 8 == 0)]

    # Preferred path: tile over batch only (full sequence per block -> no halo needed).
    if L <= max_rows:
        bt = 1
        for cand in range(1, B + 1):
            if B % cand or cand * L > max_rows:
                continue
            if B >= 2 and B // cand < 2:
                continue                    # keep >= 2 grid steps (one per v7x TensorCore)
            bt = cand
            if cand * L >= rows_cap:
                break                       # past the HBM-roofline plateau: stop growing
        if (B // bt) >= 2 or len(l_tiles) <= 1 or L < 16:
            return bt, L

    # Fallback: sequence tiling with a 1-row halo (bt = 1), used when a full-L slab is too
    # big for VMEM or when B is too small to give both v7x cores a grid step.
    candidates = [d for d in l_tiles if d < L] or [L]
    for cand in candidates:                 # descending: biggest tile that fits
        if cand <= max_rows:
            return 1, cand
    return 1, candidates[-1]                # smallest valid tile; rely on raised vmem_limit


# --------------------------------------------------------------------------------------
# Wrapper
# --------------------------------------------------------------------------------------
def interpolate_combo(x, alpha=ALPHA, scale_factor=SCALE):
    """x: (B, L, C) float -> (B, 2L, C). Inference-mode InterpolateCombo."""
    if scale_factor != SCALE:
        raise NotImplementedError("Pallas kernel is specialized to scale_factor=2")
    B, L, C = x.shape
    itemsize = jnp.dtype(x.dtype).itemsize
    c1 = 0.25 * (1.0 - alpha)
    c0 = alpha + 0.75 * (1.0 - alpha)

    # Generation-aware VMEM budget (v7x: 64 MiB/TC -> 48 MiB limit; v5e/v6e: 128 -> 96 MiB).
    try:
        vmem_cap = int(pltpu.get_tpu_info().vmem_capacity_bytes)
    except Exception:  # fall back to the most conservative current part (v7x per-TC)
        vmem_cap = 64 << 20
    vmem_limit = max(32 << 20, min(3 * vmem_cap // 4, 96 << 20))
    vmem_budget = vmem_limit - (8 << 20)    # headroom for masks / compiler-internal scratch

    bt, Lt = _choose_tiling(B, L, C, itemsize, vmem_budget)
    n_b, n_l = B // bt, L // Lt
    grid = (n_b, n_l)

    cost = pl.CostEstimate(
        flops=6 * B * L * C,                       # 2 mul + 1 add per output element
        transcendentals=0,
        bytes_accessed=3 * B * L * C * itemsize,   # read B*L*C, write 2*B*L*C
    )
    compiler_params = pltpu.CompilerParams(
        dimension_semantics=("parallel", "parallel"),
        vmem_limit_bytes=int(vmem_limit),
    )
    out_shape = jax.ShapeDtypeStruct((B, L, SCALE * C), x.dtype)
    x_spec = pl.BlockSpec((bt, Lt, C), lambda bi, li: (bi, li, 0))
    out_spec = pl.BlockSpec((bt, Lt, SCALE * C), lambda bi, li: (bi, li, 0))

    if n_l == 1:
        kernel = functools.partial(_combo_batch_kernel, c0=c0, c1=c1)
        out = pl.pallas_call(
            kernel,
            out_shape=out_shape,
            grid_spec=pltpu.PrefetchScalarGridSpec(
                num_scalar_prefetch=0, grid=grid,
                in_specs=[x_spec], out_specs=out_spec),
            compiler_params=compiler_params,
            cost_estimate=cost,
        )(x)
    else:
        assert bt == 1  # L-tiled path always uses a single batch row per block
        # 1-row halo per (batch, tile): [x[:, li*Lt - 1], x[:, (li+1)*Lt]], edge-clamped.
        starts = np.arange(n_l) * Lt
        prev_idx = np.maximum(starts - 1, 0)
        next_idx = np.minimum(starts + Lt, L - 1)
        halo = jnp.stack([x[:, prev_idx, :], x[:, next_idx, :]], axis=2)   # (B, n_l, 2, C)
        halo_spec = pl.BlockSpec((1, 1, 2, C), lambda bi, li: (bi, li, 0, 0))
        kernel = functools.partial(_combo_ltiled_kernel, c0=c0, c1=c1)
        out = pl.pallas_call(
            kernel,
            out_shape=out_shape,
            grid_spec=pltpu.PrefetchScalarGridSpec(
                num_scalar_prefetch=0, grid=grid,
                in_specs=[x_spec, halo_spec], out_specs=out_spec),
            compiler_params=compiler_params,
            cost_estimate=cost,
        )(x, halo)

    # (B, L, 2C) row-major is byte-identical to (B, 2L, C): free reshape.
    return out.reshape(B, SCALE * L, C)


# --------------------------------------------------------------------------------------
# Reference + demo
# --------------------------------------------------------------------------------------
def _reference(xn, alpha=ALPHA):
    """NumPy reference implementing PyTorch F.interpolate semantics exactly."""
    B, L, C = xn.shape
    out_L = SCALE * L
    # nearest: src = floor(i * in/out)
    near_idx = np.floor(np.arange(out_L) * (L / out_L)).astype(np.int64)
    near = xn[:, near_idx, :]
    # linear, align_corners=False: src = (i + 0.5) * in/out - 0.5, clamped at 0
    src = (np.arange(out_L) + 0.5) * (L / out_L) - 0.5
    src = np.clip(src, 0.0, None)
    i0 = np.floor(src).astype(np.int64)
    lam = (src - i0).astype(np.float32)
    i0 = np.clip(i0, 0, L - 1)
    i1 = np.clip(i0 + 1, 0, L - 1)
    lin = (1.0 - lam)[None, :, None] * xn[:, i0, :] + lam[None, :, None] * xn[:, i1, :]
    return alpha * near + (1.0 - alpha) * lin


if __name__ == "__main__":
    key = jax.random.PRNGKey(0)
    cases = [
        (2, 8, 128),    # batch-tiled path, lane-aligned C (two unmasked stores)
        (8, 16, 128),   # batch-tiled path with bt > 1 (single vectorized multi-slab pass)
        (1, 32, 128),   # L-tiled halo path (keeps >= 2 grid steps when B == 1)
        (2, 8, 96),     # C % 128 != 0 -> single concatenated lane-dense store
    ]
    for (B, L, C) in cases:
        key, sub = jax.random.split(key)
        x = jax.random.normal(sub, (B, L, C), dtype=jnp.float32)
        out = jax.block_until_ready(interpolate_combo(x))
        assert out.shape == (B, SCALE * L, C), out.shape
        ref = _reference(np.asarray(x))
        np.testing.assert_allclose(np.asarray(out), ref, rtol=1e-5, atol=1e-5)
    print("KERNEL_OK")
</pallas_src>

<mosaic_0001>
module attributes {stable_mosaic.version = 11 : i64} {
  func.func @_combo_batch_kernel(%arg0: i32, %arg1: i32, %arg2: memref<1x8x128xf32, #tpu.memory_space<vmem>>, %arg3: memref<1x8x256xf32, #tpu.memory_space<vmem>>) attributes {dimension_semantics = [#tpu.dimension_semantics<parallel>, #tpu.dimension_semantics<parallel>], iteration_bounds = array<i64: 2, 1>, scalar_prefetch = 0 : i64, scratch_operands = 0 : i64, tpu.core_type = #tpu.core_type<tc>, window_params = [{transform_indices = @transform_0, window_bounds = array<i64: 1, 8, 128>}, {transform_indices = @transform_1, window_bounds = array<i64: 1, 8, 256>}]} {
    %c0 = arith.constant 0 : index
    %c0_0 = arith.constant 0 : index
    %c0_1 = arith.constant 0 : index
    %0 = vector.load %arg2[%c0, %c0_0, %c0_1] : memref<1x8x128xf32, #tpu.memory_space<vmem>>, vector<1x8x128xf32>
    %1 = vector.shape_cast %0 : vector<1x8x128xf32> to vector<8x128xf32>
    %c1_i32 = arith.constant 1 : i32
    %2 = tpu.dynamic_rotate %1 by %c1_i32 dim 0 : vector<8x128xf32>, i32 -> vector<8x128xf32>
    %c7_i32 = arith.constant 7 : i32
    %3 = tpu.dynamic_rotate %1 by %c7_i32 dim 0 : vector<8x128xf32>, i32 -> vector<8x128xf32>
    %4 = tpu.iota {dimensions = array<i32: 1>} : vector<1x8x128xi32>
    %5 = vector.shape_cast %4 : vector<1x8x128xi32> to vector<8x128xi32>
    %c0_i32 = arith.constant 0 : i32
    %6 = vector.broadcast %c0_i32 : i32 to vector<8x128xi32>
    %7 = arith.cmpi eq, %5, %6 : vector<8x128xi32>
    %8 = arith.select %7, %1, %2 : vector<8x128xi1>, vector<8x128xf32>
    %c7_i32_2 = arith.constant 7 : i32
    %9 = vector.broadcast %c7_i32_2 : i32 to vector<8x128xi32>
    %10 = arith.cmpi eq, %5, %9 : vector<8x128xi32>
    %11 = arith.select %10, %1, %3 : vector<8x128xi1>, vector<8x128xf32>
    %cst = arith.constant 9.167500e-01 : f32
    %12 = vector.broadcast %cst : f32 to vector<8x128xf32>
    %13 = arith.mulf %12, %1 : vector<8x128xf32>
    %cst_3 = arith.constant 8.325000e-02 : f32
    %14 = vector.broadcast %cst_3 : f32 to vector<8x128xf32>
    %15 = arith.mulf %14, %8 : vector<8x128xf32>
    %16 = arith.addf %13, %15 : vector<8x128xf32>
    %cst_4 = arith.constant 9.167500e-01 : f32
    %17 = vector.broadcast %cst_4 : f32 to vector<8x128xf32>
    %18 = arith.mulf %17, %1 : vector<8x128xf32>
    %cst_5 = arith.constant 8.325000e-02 : f32
    %19 = vector.broadcast %cst_5 : f32 to vector<8x128xf32>
    %20 = arith.mulf %19, %11 : vector<8x128xf32>
    %21 = arith.addf %18, %20 : vector<8x128xf32>
    %22 = vector.shape_cast %16 : vector<8x128xf32> to vector<1x8x128xf32>
    %c0_6 = arith.constant 0 : index
    %c0_7 = arith.constant 0 : index
    %c0_8 = arith.constant 0 : index
    %23 = vector.load %arg3[%c0_6, %c0_7, %c0_8] : memref<1x8x256xf32, #tpu.memory_space<vmem>>, vector<1x8x128xf32>
    tpu.vector_store %arg3[%c0_6, %c0_7, %c0_8], %22 {strides = array<i32>} : memref<1x8x256xf32, #tpu.memory_space<vmem>>, vector<1x8x128xf32>,
    %24 = vector.shape_cast %21 : vector<8x128xf32> to vector<1x8x128xf32>
    %c0_9 = arith.constant 0 : index
    %c0_10 = arith.constant 0 : index
    %c128 = arith.constant 128 : index
    %25 = vector.load %arg3[%c0_9, %c0_10, %c128] : memref<1x8x256xf32, #tpu.memory_space<vmem>>, vector<1x8x128xf32>
    tpu.vector_store %arg3[%c0_9, %c0_10, %c128], %24 {strides = array<i32>} : memref<1x8x256xf32, #tpu.memory_space<vmem>>, vector<1x8x128xf32>,
    return
  }
  func.func @transform_0(%arg0: i32, %arg1: i32) -> (i32, i32, i32) {
    %c0_i32 = arith.constant 0 : i32
    %c0_i32_0 = arith.constant 0 : i32
    return %arg0, %arg1, %c0_i32 : i32, i32, i32
  }
  func.func @transform_1(%arg0: i32, %arg1: i32) -> (i32, i32, i32) {
    %c0_i32 = arith.constant 0 : i32
    %c0_i32_0 = arith.constant 0 : i32
    return %arg0, %arg1, %c0_i32 : i32, i32, i32
  }
}

</mosaic_0001>

<llo_original>
// kernel: tpu_custom_call.1
$region0: #{tpu_custom_call.1}
  #allocation0 [shape = 'u32[]', space=smem, size = 0x4, offset = 0x4, fixed_abs, tag = 'smem constant byte address 0x4 - core index']
  #allocation1 [shape = 'u32[72,128]{1,0:T(1,128)}', space=vmem, size = 0x9000, scoped, tag = 'internal scratch']
  %s0 = inlined_call_operand.hbm [shape: f32[2,8,128], index: 0, kind: input, shape index: {}]
  %s1 = inlined_call_operand.hbm [shape: f32[2,8,256], index: 1, kind: output, shape index: {}]
  %s2 = sld [smem:[#allocation0]]
  $region41: #{tpu_custom_call.1} parent=0
    _
  %s4 = ssub.s32 1, %s2
  %s5 = scalar_select 0, %s4, %s2
  $region1: #{tpu_custom_call.1} parent=0
    #allocation2 [shape = 'u8[8192]{0}', space=vmem, size = 0x2000, scoped, tag = 'input window, operand 0']
    #allocation3 [shape = 's32[2]{0}', space=sflag, size = 0x8, scoped, tag = 'scoped memory for tpu_custom_call.1']
    #allocation4 [shape = 's32[2]{0}', space=sflag, size = 0x8, scoped, tag = 'scoped memory for tpu_custom_call.1']
    #allocation5 [shape = 'u8[16384]{0}', space=vmem, size = 0x4000, scoped, tag = 'output window, operand 0']
    %6 = vsyncpa [#allocation3], 0
    %s7 = scalar_lea.sflag [#allocation3], 1
    %8 = vsyncpa %s7, 0
    %9 = vsyncpa [#allocation4], 0
    %s10 = scalar_lea.sflag [#allocation4], 1
    %11 = vsyncpa %s10, 0
    loop: start=0, step=1, limit=4
    $region2: #{tpu_custom_call.1} parent=1 // loop_pre_header
      _
    $region3: #{tpu_custom_call.1} parent=1 // loop_header
      %s13 = sphi 0, %s17
      %p14 = scmp.ge.s32.totalorder %s13, 4
      %s20 = sphi 0, %s32
      %s21 = sphi 0, %s28
      %s22 = sphi 0, %s20
      %s23 = sphi 0, %s21
      %s24 = sphi 0, %s22
      %s25 = sphi 0, %s23
      %s37 = sphi 0, %s39
      %s40 = sphi 0, %s37
      %s41 = sphi 0, %s40
      %s57 = sphi 0, %s41
      %s65 = sphi 0, %s67
      %s68 = sphi 0, %s65
      %s69 = sphi 0, %s68
      %s85 = sphi 0, %s69
    $region4: #{tpu_custom_call.1} parent=1 // loop_header_branch
      %16 = sbr.rel (%p14) target = $region8
    $region5: #{tpu_custom_call.1} parent=1 // loop_body
      %s18 = ssub.s32 %s13, 1
      %s19 = ssub.s32 %s13, 2
      %s26 = sadd.s32 1, %s21
      %p27 = scmp.ge.s32.totalorder %s26, 1
      %s28 = scalar_select %p27, 0, %s26
      %s29 = sadd.s32 1, %s20
      %s30 = scalar_select %p27, %s29, %s20
      %p31 = scmp.ge.s32.totalorder %s30, 2
      %s32 = scalar_select %p31, 0, %s30
      %s33 = ssub.s32 %s20, %s32
      %s34 = ssub.s32 %s21, %s28
      %s35 = sor.u32 %s33, %s34
      %p36 = scmp.eq.s32.totalorder %s35, 0
      %s38 = sadd.s32 %s37, 1
      %s39 = scalar_select %p36, %s37, %s38
      %p42 = pneg %p36
      %p43 = scmp.eq.s32.totalorder %s13, 1
      %p44 = por %p42, %p43
      %p45 = scmp.ne.s32.totalorder %s37, %s40
      %p46 = scmp.eq.s32.totalorder %s13, 0
      %p47 = por %p45, %p46
      %p48 = scmp.ne.s32.totalorder %s37, %s40
      %p49 = scmp.eq.s32.totalorder %s18, 1
      %p50 = por %p48, %p49
      %p51 = scmp.ne.s32.totalorder %s40, %s41
      %p52 = scmp.eq.s32.totalorder %s18, 0
      %p53 = por %p51, %p52
      %p54 = scmp.ne.s32.totalorder %s40, %s41
      %p55 = scmp.eq.s32.totalorder %s19, 1
      %p56 = por %p54, %p55
      %p58 = scmp.ne.s32.totalorder %s41, %s57
      %p59 = scmp.eq.s32.totalorder %s19, 0
      %p60 = por %p58, %p59
      %s61 = ssub.s32 %s20, %s32
      %s62 = ssub.s32 %s21, %s28
      %s63 = sor.u32 %s61, %s62
      %p64 = scmp.eq.s32.totalorder %s63, 0
      %s66 = sadd.s32 %s65, 1
      %s67 = scalar_select %p64, %s65, %s66
      %p70 = pneg %p64
      %p71 = scmp.eq.s32.totalorder %s13, 1
      %p72 = por %p70, %p71
      %p73 = scmp.ne.s32.totalorder %s65, %s68
      %p74 = scmp.eq.s32.totalorder %s13, 0
      %p75 = por %p73, %p74
      %p76 = scmp.ne.s32.totalorder %s65, %s68
      %p77 = scmp.eq.s32.totalorder %s18, 1
      %p78 = por %p76, %p77
      %p79 = scmp.ne.s32.totalorder %s68, %s69
      %p80 = scmp.eq.s32.totalorder %s18, 0
      %p81 = por %p79, %p80
      %p82 = scmp.ne.s32.totalorder %s68, %s69
      %p83 = scmp.eq.s32.totalorder %s19, 1
      %p84 = por %p82, %p83
      %p86 = scmp.ne.s32.totalorder %s69, %s85
      %p87 = scmp.eq.s32.totalorder %s19, 0
      %p88 = por %p86, %p87
      %p89 = scmp.le.s32.totalorder 1, %s13
      %p90 = scmp.lt.s32.totalorder %s13, 3
      %p91 = pnand %p89, %p90
      %p92 = pneg %p91
      // Predicated region
      $region9: #{tpu_custom_call.1} parent=5 // pred_check
        _
      $region10: #{tpu_custom_call.1} parent=5 // pred_check_branch
        %94 = sbr.rel (%p91) target = $region12
      $region11: #{tpu_custom_call.1} parent=5 // pred_region
        %s95 = ssub.s32 %s13, 1
      $region12: #{tpu_custom_call.1} parent=5 // pred_fallthru
        _
      %p96 = scmp.lt.s32.totalorder %s13, 2
      // Predicated region
      $region13: #{tpu_custom_call.1} parent=5 // pred_check
        %p97 = pneg %p96
      $region14: #{tpu_custom_call.1} parent=5 // pred_check_branch
        %99 = sbr.rel (%p97) target = $region16
      $region15: #{tpu_custom_call.1} parent=5 // pred_region
        // Predicated region
        $region17: #{tpu_custom_call.1} parent=15 // pred_check
          %p100 = pneg %p47
        $region18: #{tpu_custom_call.1} parent=15 // pred_check_branch
          %102 = sbr.rel (%p100) target = $region20
        $region19: #{tpu_custom_call.1} parent=15 // pred_region
          %s103 = sand.u32 %s37, 1
          %s104 = scalar_lea.sflag [#allocation3], %s103
          %s105 = sand.u32 %s37, 1
          %s106 = smul.addr %s105, 8
          %s107 = scalar_lea.vmem [#allocation2], %s106
          %109 = vsyncadd %s104, 0
          %s110 = sadd.s32 %s21, %s20
          %s111 = smul.addr %s110, 8
          %s112 = scalar_lea.hbm %s0, %s111
          %s114 = sshll.u32 %s112, 4
          %s115 = int_to_ptr.hbm [resolvable:$true] %s114
          %s116 = sshll.u32 %s107, 4
          %s117 = int_to_ptr.vmem [resolvable:$true] %s116
          %119 = dma.hbm_to_vmem [thread:$0]  %s115, 128, %s117, %s104
        $region20: #{tpu_custom_call.1} parent=15 // pred_fallthru
          _
      $region16: #{tpu_custom_call.1} parent=5 // pred_fallthru
        _
      %p120 = scmp.le.s32.totalorder 1, %s13
      %p121 = scmp.lt.s32.totalorder %s13, 3
      %p122 = pnand %p120, %p121
      %p123 = pneg %p122
      // Predicated region
      $region21: #{tpu_custom_call.1} parent=5 // pred_check
        _
      $region22: #{tpu_custom_call.1} parent=5 // pred_check_branch
        %125 = sbr.rel (%p122) target = $region24
      $region23: #{tpu_custom_call.1} parent=5 // pred_region
        %s126 = ssub.s32 %s13, 1
        %s127 = sand.u32 %s40, 1
        %s128 = scalar_lea.sflag [#allocation3], %s127
        %s129 = sand.u32 %s40, 1
        %s130 = smul.addr %s129, 8
        %s131 = scalar_lea.vmem [#allocation2], %s130
        // Predicated region
        $region25: #{tpu_custom_call.1} parent=23 // pred_check
          %p132 = pneg %p53
        $region26: #{tpu_custom_call.1} parent=23 // pred_check_branch
          %134 = sbr.rel (%p132) target = $region28
        $region27: #{tpu_custom_call.1} parent=23 // pred_region
          %136 = dma.done %s128, 128
        $region28: #{tpu_custom_call.1} parent=23 // pred_fallthru
          _
        %s137 = sand.u32 %s40, 1
        %s138 = scalar_lea.sflag [#allocation3], %s137
        %s139 = sand.u32 %s40, 1
        %s140 = smul.addr %s139, 8
        %s141 = scalar_lea.vmem [#allocation2], %s140
        %p142 = pneg %p53
        %p143 = pneg %p50
        %p144 = pneg %p81
        %p145 = pneg %p78
        %s146 = sand.u32 %s68, 1
        %s147 = scalar_lea.sflag [#allocation4], %s146
        %s148 = sand.u32 %s68, 1
        %s149 = smul.addr %s148, 16
        %s150 = scalar_lea.vmem [#allocation5], %s149
        %v151 = vld [vmem:[%s131] sm:$0xff]
        %v152 = vrot.slane %v151, 7
        %v153 = vrot.slane %v151, 1
        %v154 = vlaneseq
        %v155 = vshrl.u32 %v154, 7
        %vm156 = vcmp.eq.s32.totalorder %v155, 0
        %v157 = vsel %vm156, %v151, %v152
        %vm158 = vcmp.eq.s32.totalorder %v155, 7
        %v159 = vsel %vm158, %v151, %v153
        %v160 = vmul.f32 %v151, 0.91675
        %v161 = vmul.f32 %v157, 0.08325
        %v162 = vadd.f32 %v160, %v161
        %v163 = vmul.f32 %v159, 0.08325
        %v164 = vadd.f32 %v160, %v163
        %165 = vst [vmem:[%s150] sm:$0xff] %v162
        %166 = vst [vmem:[%s150 + $0x8] sm:$0xff] %v164
        %s167 = sand.u32 %s68, 1
        %s168 = scalar_lea.sflag [#allocation4], %s167
        %s169 = sand.u32 %s68, 1
        %s170 = smul.addr %s169, 16
        %s171 = scalar_lea.vmem [#allocation5], %s170
        // Predicated region
        $region29: #{tpu_custom_call.1} parent=23 // pred_check
          %p172 = pneg %p78
        $region30: #{tpu_custom_call.1} parent=23 // pred_check_branch
          %174 = sbr.rel (%p172) target = $region32
        $region31: #{tpu_custom_call.1} parent=23 // pred_region
          %176 = vsyncadd %s168, 0
          %s177 = smul.addr %s23, 2
          %s178 = smul.addr %s22, 2
          %s179 = sadd.s32 %s177, %s178
          %s180 = smul.addr %s179, 8
          %s181 = scalar_lea.hbm %s1, %s180
          %s183 = sshll.u32 %s171, 4
          %s184 = int_to_ptr.vmem [resolvable:$true] %s183
          %s185 = sshll.u32 %s181, 4
          %s186 = int_to_ptr.hbm [resolvable:$true] %s185
          %188 = dma.vmem_to_hbm [thread:$0]  %s184, 256, %s186, %s168
        $region32: #{tpu_custom_call.1} parent=23 // pred_fallthru
          _
      $region24: #{tpu_custom_call.1} parent=5 // pred_fallthru
        _
      %p189 = scmp.le.s32.totalorder 2, %s13
      // Predicated region
      $region33: #{tpu_custom_call.1} parent=5 // pred_check
        %p190 = pneg %p189
      $region34: #{tpu_custom_call.1} parent=5 // pred_check_branch
        %192 = sbr.rel (%p190) target = $region36
      $region35: #{tpu_custom_call.1} parent=5 // pred_region
        %s193 = ssub.s32 %s13, 2
        // Predicated region
        $region37: #{tpu_custom_call.1} parent=35 // pred_check
          %p194 = pneg %p84
        $region38: #{tpu_custom_call.1} parent=35 // pred_check_branch
          %196 = sbr.rel (%p194) target = $region40
        $region39: #{tpu_custom_call.1} parent=35 // pred_region
          %s197 = sand.u32 %s69, 1
          %s198 = scalar_lea.sflag [#allocation4], %s197
          %s199 = sand.u32 %s69, 1
          %s200 = smul.addr %s199, 16
          %s201 = scalar_lea.vmem [#allocation5], %s200
          %203 = dma.done %s198, 256
        $region40: #{tpu_custom_call.1} parent=35 // pred_fallthru
          _
      $region36: #{tpu_custom_call.1} parent=5 // pred_fallthru
        _
    $region6: #{tpu_custom_call.1} parent=1 // loop_footer
      %s17 = sadd.s32 1, %s13
    $region7: #{tpu_custom_call.1} parent=1 // loop_footer_branch
      %12 = sbr.rel target = $region3
    $region8: #{tpu_custom_call.1} parent=1 // loop_exit
      _
    %204 = vsyncpa [#allocation3], 1
    %s205 = scalar_lea.sflag [#allocation3], 1
    %206 = vsyncpa %s205, 1
    %207 = vsyncpa [#allocation4], 1
    %s208 = scalar_lea.sflag [#allocation4], 1
    %209 = vsyncpa %s208, 1

</llo_original>
